<compile_context>
chip_gen: v7x
topology: tpu7x:2x2x1
jax: 0.10.0
libtpu: 0.0.40
codegen_flags: <defaults>
</compile_context>

<pallas_src>
import functools

import jax
import jax.numpy as jnp
from jax.experimental import pallas as pl
from jax.experimental.pallas import tpu as pltpu


def _attentive_pool_kernel(x_ref, w1_ref, b1_ref, w2_ref, out_ref, wts_ref,
                           *, s_valid):
    # x_ref block: (TB, S_pad, D)
    TB, S, D = x_ref.shape

    x = x_ref[...]                                   # (TB, S, D)
    x2 = x.reshape(TB * S, D)                        # layout no-op (S % 8 == 0)

    # linear1 + tanh:  (TB*S, D) @ (D, H) -> (TB*S, H), f32 accumulation on MXU.
    h = jnp.tanh(
        jnp.dot(x2, w1_ref[...], preferred_element_type=jnp.float32)
        + b1_ref[...].astype(jnp.float32))           # (1, H) broadcast

    # linear2 on the VPU; scores lane-dense as (TB, S).  b2 cancels in softmax.
    w2_row = w2_ref[...].astype(jnp.float32)         # (1, H)
    s = jnp.sum(h * w2_row, axis=-1).reshape(TB, S)  # (TB, S)

    # Mask padded sequence positions (static: s_valid is a Python int).
    if s_valid < S:
        col = jax.lax.broadcasted_iota(jnp.int32, (TB, S), 1)
        s = jnp.where(col < s_valid, s, -jnp.inf)

    # softmax over the sequence axis (PyTorch dim=1) -> lane reduce.
    m = jnp.max(s, axis=-1, keepdims=True)           # (TB, 1)
    e = jnp.exp(s - m)                               # (TB, S)
    w = e * pl.reciprocal(jnp.sum(e, axis=-1, keepdims=True), approx=False)

    # pooled[b, :] = sum_s w[b, s] * x[b, s, :]  -> (TB, D)
    # Multiply in the input dtype (bf16-native on v6e/v7x), accumulate in f32.
    wx = w.astype(x.dtype)[:, :, None] * x           # (TB, S, D)
    pooled = jnp.sum(wx, axis=1, dtype=jnp.float32)  # (TB, D)

    out_ref[...] = pooled.astype(out_ref.dtype)      # sublane/lane-dense store
    wts_ref[...] = w.astype(wts_ref.dtype)


def _round_up(n, m):
    return ((n + m - 1) // m) * m


def attentive_pooling(x, w1_t, b1, w2_row, b2=None, *,
                      vmem_budget_bytes=40 << 20,
                      target_block_bytes=4 << 20):
    """AttentivePooling forward.

    x:      (B, S, D)
    w1_t:   (D, H)   = linear1.weight.T
    b1:     (1, H)   = linear1.bias
    w2_row: (1, H)   = linear2.weight
    b2:     linear2.bias -- accepted for API parity but NOT used: softmax is
            shift-invariant, so b2 has no effect on either output.

    Returns (pooled (B, D), attn_weights (B, S)).
    """
    del b2  # constant shift under softmax; mathematically a no-op.

    B, S, D = x.shape
    H = w1_t.shape[1]
    b1 = jnp.reshape(b1, (1, H))
    w2_row = jnp.reshape(w2_row, (1, H))
    itemsize = jnp.dtype(x.dtype).itemsize

    S_pad = _round_up(S, 8)

    # Per-batch-row VMEM footprint (bytes) of one grid step (double-buffered
    # input/outputs + f32 temps), used to size TB and the scoped-VMEM limit.
    per_row = (2 * S_pad * D * itemsize            # x block, double buffered
               + S_pad * D * max(itemsize, 4)      # w*x temp
               + S_pad * H * 4                     # h (f32)
               + 2 * D * itemsize                  # pooled out, double buffered
               + 2 * S_pad * itemsize              # wts out, double buffered
               + 8 * S_pad)                        # score / exp temps
    fixed = 2 * (D * H + 2 * H) * max(itemsize, 4)  # resident weight tiles

    # TB: biggest multiple of 8 that (a) fits the VMEM budget and (b) gives an
    # x block near the ~4 MiB HBM-roofline sweet spot.
    tb_vmem = max(8, ((vmem_budget_bytes - fixed) // per_row) // 8 * 8)
    tb_target = max(8, (target_block_bytes // max(1, S_pad * D * itemsize)) // 8 * 8)
    tb = min(tb_vmem, tb_target)

    # Keep >= 2 grid steps when B allows it (v7x megacore: one step per core).
    b8 = _round_up(B, 8)
    if b8 >= 16:
        tb = min(tb, max(8, (b8 // 2) // 8 * 8))
    else:
        tb = min(tb, 8)

    B_pad = _round_up(B, tb)

    # Zero-pad batch / sequence. Zero rows give finite scores (softmax is
    # well-defined); padded outputs are sliced off below.
    if (B_pad != B) or (S_pad != S):
        x = jnp.pad(x, ((0, B_pad - B), (0, S_pad - S), (0, 0)))

    # Scoped VMEM limit: above the 16/32 MiB defaults, below v7x's 64 MiB.
    need = tb * per_row + fixed
    vmem_limit = int(min(56 << 20, max(32 << 20, need * 5 // 4)))

    kernel = functools.partial(_attentive_pool_kernel, s_valid=S)

    grid_spec = pltpu.PrefetchScalarGridSpec(
        num_scalar_prefetch=0,
        grid=(B_pad // tb,),
        in_specs=[
            pl.BlockSpec((tb, S_pad, D), lambda b: (b, 0, 0)),  # x: TB rows/step
            pl.BlockSpec((D, H), lambda b: (0, 0)),             # W1^T (resident)
            pl.BlockSpec((1, H), lambda b: (0, 0)),             # b1
            pl.BlockSpec((1, H), lambda b: (0, 0)),             # W2 row
        ],
        out_specs=[
            pl.BlockSpec((tb, D), lambda b: (b, 0)),            # pooled
            pl.BlockSpec((tb, S_pad), lambda b: (b, 0)),        # attn weights
        ],
    )

    pooled, wts = pl.pallas_call(
        kernel,
        out_shape=(
            jax.ShapeDtypeStruct((B_pad, D), x.dtype),
            jax.ShapeDtypeStruct((B_pad, S_pad), x.dtype),
        ),
        grid_spec=grid_spec,
        compiler_params=pltpu.CompilerParams(
            dimension_semantics=("parallel",),
            vmem_limit_bytes=vmem_limit),
    )(x, w1_t, b1, w2_row)

    return pooled[:B], wts[:B, :S]


def attentive_pooling_ref(x, w1_t, b1, w2_row, b2):
    """Pure-JAX reference matching the PyTorch forward (keeps b2)."""
    h = jnp.tanh(jnp.einsum("bsd,dh->bsh", x, w1_t) + b1[0])
    s = jnp.einsum("bsh,h->bs", h, w2_row[0]) + b2[0, 0]     # (B, S)
    w = jax.nn.softmax(s, axis=1)                            # softmax over seq
    pooled = jnp.einsum("bs,bsd->bd", w, x)                  # (B, D)
    return pooled, w


if __name__ == "__main__":
    # Small shapes consistent with the module's forward (B, S, D) / hidden H.
    B, S, D, H = 16, 16, 128, 64

    key = jax.random.PRNGKey(0)
    kx, k1, kb1, k2, kb2 = jax.random.split(key, 5)

    x = jax.random.normal(kx, (B, S, D), dtype=jnp.float32)
    # PyTorch Linear stores (out, in); W1 is pre-transposed to (D, H) and W2
    # kept in its native (1, H) row layout.
    w1_t = jax.random.normal(k1, (D, H), dtype=jnp.float32) * 0.05
    b1 = jax.random.normal(kb1, (1, H), dtype=jnp.float32) * 0.05
    w2 = jax.random.normal(k2, (1, H), dtype=jnp.float32) * 0.05
    b2 = jax.random.normal(kb2, (1, 1), dtype=jnp.float32) * 0.05

    pooled, wts = attentive_pooling(x, w1_t, b1, w2, b2)
    jax.block_until_ready((pooled, wts))

    pooled_exp, wts_exp = attentive_pooling_ref(x, w1_t, b1, w2, b2)
    assert jnp.allclose(pooled, pooled_exp, atol=1e-4, rtol=1e-4), (
        float(jnp.max(jnp.abs(pooled - pooled_exp))))
    assert jnp.allclose(wts, wts_exp, atol=1e-4, rtol=1e-4), (
        float(jnp.max(jnp.abs(wts - wts_exp))))

    print("KERNEL_OK")
</pallas_src>

<mosaic_0001>
module attributes {stable_mosaic.version = 11 : i64} {
  func.func @_attentive_pool_kernel(%arg0: i32, %arg1: memref<8x16x128xf32, #tpu.memory_space<vmem>>, %arg2: memref<128x64xf32, #tpu.memory_space<vmem>>, %arg3: memref<1x64xf32, #tpu.memory_space<vmem>>, %arg4: memref<1x64xf32, #tpu.memory_space<vmem>>, %arg5: memref<8x128xf32, #tpu.memory_space<vmem>>, %arg6: memref<8x16xf32, #tpu.memory_space<vmem>>) attributes {dimension_semantics = [#tpu.dimension_semantics<parallel>], iteration_bounds = array<i64: 2>, scalar_prefetch = 0 : i64, scratch_operands = 0 : i64, tpu.core_type = #tpu.core_type<tc>, window_params = [{transform_indices = @transform_0, window_bounds = array<i64: 8, 16, 128>}, {pipeline_mode = #tpu.pipeline_mode<synchronous>, transform_indices = @transform_1, window_bounds = array<i64: 128, 64>}, {pipeline_mode = #tpu.pipeline_mode<synchronous>, transform_indices = @transform_2, window_bounds = array<i64: 1, 64>}, {pipeline_mode = #tpu.pipeline_mode<synchronous>, transform_indices = @transform_3, window_bounds = array<i64: 1, 64>}, {transform_indices = @transform_4, window_bounds = array<i64: 8, 128>}, {transform_indices = @transform_5, window_bounds = array<i64: 8, 16>}]} {
    %c0 = arith.constant 0 : index
    %c0_0 = arith.constant 0 : index
    %c0_1 = arith.constant 0 : index
    %0 = vector.load %arg1[%c0, %c0_0, %c0_1] : memref<8x16x128xf32, #tpu.memory_space<vmem>>, vector<8x16x128xf32>
    %1 = vector.shape_cast %0 : vector<8x16x128xf32> to vector<128x128xf32>
    %c0_2 = arith.constant 0 : index
    %c0_3 = arith.constant 0 : index
    %2 = vector.load %arg2[%c0_2, %c0_3] : memref<128x64xf32, #tpu.memory_space<vmem>>, vector<128x64xf32>
    %cst = arith.constant dense<0.000000e+00> : vector<128x64xf32>
    %3 = tpu.matmul %1, %2, %cst {dimension_numbers = #tpu.dot_dimension_numbers<[1], [0], [0], [1], [0, 0, 1, 1], [], []>} : vector<128x128xf32>, vector<128x64xf32>, vector<128x64xf32> -> vector<128x64xf32>
    %c0_4 = arith.constant 0 : index
    %c0_5 = arith.constant 0 : index
    %4 = vector.load %arg3[%c0_4, %c0_5] : memref<1x64xf32, #tpu.memory_space<vmem>>, vector<1x64xf32>
    %5 = vector.broadcast %4 : vector<1x64xf32> to vector<128x64xf32>
    %6 = arith.addf %3, %5 : vector<128x64xf32>
    %7 = math.tanh %6 : vector<128x64xf32>
    %c0_6 = arith.constant 0 : index
    %c0_7 = arith.constant 0 : index
    %8 = vector.load %arg4[%c0_6, %c0_7] : memref<1x64xf32, #tpu.memory_space<vmem>>, vector<1x64xf32>
    %9 = vector.broadcast %8 : vector<1x64xf32> to vector<128x64xf32>
    %10 = arith.mulf %7, %9 : vector<128x64xf32>
    %cst_8 = arith.constant dense<0.000000e+00> : vector<128xf32>
    %11 = vector.multi_reduction <add>, %10, %cst_8 [1] : vector<128x64xf32> to vector<128xf32>
    %12 = vector.shape_cast %11 : vector<128xf32> to vector<8x16xf32>
    %cst_9 = arith.constant dense<0xFF800000> : vector<8xf32>
    %13 = vector.multi_reduction <maximumf>, %12, %cst_9 [1] : vector<8x16xf32> to vector<8xf32>
    %14 = vector.shape_cast %13 : vector<8xf32> to vector<8x1xf32>
    %15 = vector.broadcast %14 : vector<8x1xf32> to vector<8x16xf32>
    %16 = arith.subf %12, %15 : vector<8x16xf32>
    %17 = math.exp %16 : vector<8x16xf32>
    %cst_10 = arith.constant dense<0.000000e+00> : vector<8xf32>
    %18 = vector.multi_reduction <add>, %17, %cst_10 [1] : vector<8x16xf32> to vector<8xf32>
    %19 = vector.shape_cast %18 : vector<8xf32> to vector<8x1xf32>
    %20 = tpu.reciprocal %19 : vector<8x1xf32> -> vector<8x1xf32>
    %21 = vector.broadcast %20 : vector<8x1xf32> to vector<8x16xf32>
    %22 = arith.mulf %17, %21 : vector<8x16xf32>
    %23 = vector.shape_cast %22 : vector<8x16xf32> to vector<8x16x1xf32>
    %24 = vector.broadcast %23 : vector<8x16x1xf32> to vector<8x16x128xf32>
    %25 = arith.mulf %24, %0 : vector<8x16x128xf32>
    %cst_11 = arith.constant dense<0.000000e+00> : vector<8x128xf32>
    %26 = vector.multi_reduction <add>, %25, %cst_11 [1] : vector<8x16x128xf32> to vector<8x128xf32>
    %c0_12 = arith.constant 0 : index
    %c0_13 = arith.constant 0 : index
    %27 = vector.load %arg5[%c0_12, %c0_13] : memref<8x128xf32, #tpu.memory_space<vmem>>, vector<8x128xf32>
    tpu.vector_store %arg5[%c0_12, %c0_13], %26 {strides = array<i32>} : memref<8x128xf32, #tpu.memory_space<vmem>>, vector<8x128xf32>,
    %c0_14 = arith.constant 0 : index
    %c0_15 = arith.constant 0 : index
    %28 = vector.load %arg6[%c0_14, %c0_15] : memref<8x16xf32, #tpu.memory_space<vmem>>, vector<8x16xf32>
    tpu.vector_store %arg6[%c0_14, %c0_15], %22 {strides = array<i32>} : memref<8x16xf32, #tpu.memory_space<vmem>>, vector<8x16xf32>,
    return
  }
  func.func @transform_0(%arg0: i32) -> (i32, i32, i32) {
    %c0_i32 = arith.constant 0 : i32
    %c0_i32_0 = arith.constant 0 : i32
    %c0_i32_1 = arith.constant 0 : i32
    return %arg0, %c0_i32, %c0_i32_0 : i32, i32, i32
  }
  func.func @transform_1(%arg0: i32) -> (i32, i32) {
    %c0_i32 = arith.constant 0 : i32
    %c0_i32_0 = arith.constant 0 : i32
    %c0_i32_1 = arith.constant 0 : i32
    return %c0_i32, %c0_i32_0 : i32, i32
  }
  func.func @transform_2(%arg0: i32) -> (i32, i32) {
    %c0_i32 = arith.constant 0 : i32
    %c0_i32_0 = arith.constant 0 : i32
    %c0_i32_1 = arith.constant 0 : i32
    return %c0_i32, %c0_i32_0 : i32, i32
  }
  func.func @transform_3(%arg0: i32) -> (i32, i32) {
    %c0_i32 = arith.constant 0 : i32
    %c0_i32_0 = arith.constant 0 : i32
    %c0_i32_1 = arith.constant 0 : i32
    return %c0_i32, %c0_i32_0 : i32, i32
  }
  func.func @transform_4(%arg0: i32) -> (i32, i32) {
    %c0_i32 = arith.constant 0 : i32
    %c0_i32_0 = arith.constant 0 : i32
    return %arg0, %c0_i32 : i32, i32
  }
  func.func @transform_5(%arg0: i32) -> (i32, i32) {
    %c0_i32 = arith.constant 0 : i32
    %c0_i32_0 = arith.constant 0 : i32
    return %arg0, %c0_i32 : i32, i32
  }
}

</mosaic_0001>

<llo_original>
// kernel: tpu_custom_call.1
$region0: #{tpu_custom_call.1}
  #allocation0 [shape = 'u32[]', space=smem, size = 0x4, offset = 0x4, fixed_abs, tag = 'smem constant byte address 0x4 - core index']
  #allocation1 [shape = 'u32[144,128]{1,0:T(1,128)}', space=vmem, size = 0x12000, scoped, tag = 'internal scratch']
  %s0 = inlined_call_operand.hbm [shape: f32[16,16,128], index: 0, kind: input, shape index: {}]
  %s1 = inlined_call_operand.vmem [shape: f32[128,64], index: 1, kind: input, shape index: {}]
  %s2 = inlined_call_operand.vmem [shape: f32[1,64], index: 2, kind: input, shape index: {}]
  %s3 = inlined_call_operand.vmem [shape: f32[1,64], index: 3, kind: input, shape index: {}]
  %s4 = inlined_call_operand.hbm [shape: f32[16,128], index: 4, kind: output, shape index: {0}]
  %s5 = inlined_call_operand.hbm [shape: f32[16,16], index: 5, kind: output, shape index: {1}]
  %6 = xla_tuple %s4, %s5
  %s7 = sld [smem:[#allocation0]]
  $region61: #{tpu_custom_call.1} parent=0
    _
  %s9 = ssub.s32 1, %s7
  %s10 = scalar_select 0, %s9, %s7
  $region1: #{tpu_custom_call.1} parent=0
    #allocation2 [shape = 'u8[131072]{0}', space=vmem, size = 0x20000, scoped, tag = 'input window, operand 0']
    #allocation3 [shape = 's32[2]{0}', space=sflag, size = 0x8, scoped, tag = 'scoped memory for tpu_custom_call.1']
    #allocation4 [shape = 's32[2]{0}', space=sflag, size = 0x8, scoped, tag = 'scoped memory for tpu_custom_call.1']
    #allocation5 [shape = 'u8[8192]{0}', space=vmem, size = 0x2000, scoped, tag = 'output window, operand 0']
    #allocation6 [shape = 'u8[8192]{0}', space=vmem, size = 0x2000, scoped, tag = 'output window, operand 1']
    #allocation7 [shape = 's32[2]{0}', space=sflag, size = 0x8, scoped, tag = 'scoped memory for tpu_custom_call.1']
    %11 = vsyncpa [#allocation3], 0
    %s12 = scalar_lea.sflag [#allocation3], 1
    %13 = vsyncpa %s12, 0
    %14 = vsyncpa [#allocation4], 0
    %s15 = scalar_lea.sflag [#allocation4], 1
    %16 = vsyncpa %s15, 0
    %17 = vsyncpa [#allocation7], 0
    %s18 = scalar_lea.sflag [#allocation7], 1
    %19 = vsyncpa %s18, 0
    loop: start=0, step=1, limit=4
    $region2: #{tpu_custom_call.1} parent=1 // loop_pre_header
      _
    $region3: #{tpu_custom_call.1} parent=1 // loop_header
      %s21 = sphi 0, %s25
      %p22 = scmp.ge.s32.totalorder %s21, 4
      %s31 = sphi 0, %s33
      %s34 = sphi 0, %s31
      %s35 = sphi 0, %s34
      %s51 = sphi 0, %s35
      %s55 = sphi 0, %s55
      %s57 = sphi 0, %s55
      %s58 = sphi 0, %s57
      %s72 = sphi 0, %s58
      %s76 = sphi 0, %s76
      %s78 = sphi 0, %s76
      %s79 = sphi 0, %s78
      %s93 = sphi 0, %s79
      %s97 = sphi 0, %s97
      %s99 = sphi 0, %s97
      %s100 = sphi 0, %s99
      %s114 = sphi 0, %s100
      %s120 = sphi 0, %s122
      %s123 = sphi 0, %s120
      %s124 = sphi 0, %s123
      %s140 = sphi 0, %s124
      %s146 = sphi 0, %s148
      %s149 = sphi 0, %s146
      %s150 = sphi 0, %s149
      %s166 = sphi 0, %s150
    $region4: #{tpu_custom_call.1} parent=1 // loop_header_branch
      %24 = sbr.rel (%p22) target = $region8
    $region5: #{tpu_custom_call.1} parent=1 // loop_body
      %s26 = ssub.s32 %s21, 1
      %s27 = ssub.s32 %s21, 2
      %s28 = sadd.s32 %s21, 1
      %s29 = ssub.s32 %s21, %s28
      %p30 = scmp.eq.s32.totalorder %s29, 0
      %s32 = sadd.s32 %s31, 1
      %s33 = scalar_select %p30, %s31, %s32
      %p36 = pneg %p30
      %p37 = scmp.eq.s32.totalorder %s21, 1
      %p38 = por %p36, %p37
      %p39 = scmp.ne.s32.totalorder %s31, %s34
      %p40 = scmp.eq.s32.totalorder %s21, 0
      %p41 = por %p39, %p40
      %p42 = scmp.ne.s32.totalorder %s31, %s34
      %p43 = scmp.eq.s32.totalorder %s26, 1
      %p44 = por %p42, %p43
      %p45 = scmp.ne.s32.totalorder %s34, %s35
      %p46 = scmp.eq.s32.totalorder %s26, 0
      %p47 = por %p45, %p46
      %p48 = scmp.ne.s32.totalorder %s34, %s35
      %p49 = scmp.eq.s32.totalorder %s27, 1
      %p50 = por %p48, %p49
      %p52 = scmp.ne.s32.totalorder %s35, %s51
      %p53 = scmp.eq.s32.totalorder %s27, 0
      %p54 = por %p52, %p53
      %s56 = sadd.s32 %s55, 1
      %p59 = scmp.eq.s32.totalorder %s21, 1
      %p60 = scmp.ne.s32.totalorder %s55, %s57
      %p61 = scmp.eq.s32.totalorder %s21, 0
      %p62 = por %p60, %p61
      %p63 = scmp.ne.s32.totalorder %s55, %s57
      %p64 = scmp.eq.s32.totalorder %s26, 1
      %p65 = por %p63, %p64
      %p66 = scmp.ne.s32.totalorder %s57, %s58
      %p67 = scmp.eq.s32.totalorder %s26, 0
      %p68 = por %p66, %p67
      %p69 = scmp.ne.s32.totalorder %s57, %s58
      %p70 = scmp.eq.s32.totalorder %s27, 1
      %p71 = por %p69, %p70
      %p73 = scmp.ne.s32.totalorder %s58, %s72
      %p74 = scmp.eq.s32.totalorder %s27, 0
      %p75 = por %p73, %p74
      %s77 = sadd.s32 %s76, 1
      %p80 = scmp.eq.s32.totalorder %s21, 1
      %p81 = scmp.ne.s32.totalorder %s76, %s78
      %p82 = scmp.eq.s32.totalorder %s21, 0
      %p83 = por %p81, %p82
      %p84 = scmp.ne.s32.totalorder %s76, %s78
      %p85 = scmp.eq.s32.totalorder %s26, 1
      %p86 = por %p84, %p85
      %p87 = scmp.ne.s32.totalorder %s78, %s79
      %p88 = scmp.eq.s32.totalorder %s26, 0
      %p89 = por %p87, %p88
      %p90 = scmp.ne.s32.totalorder %s78, %s79
      %p91 = scmp.eq.s32.totalorder %s27, 1
      %p92 = por %p90, %p91
      %p94 = scmp.ne.s32.totalorder %s79, %s93
      %p95 = scmp.eq.s32.totalorder %s27, 0
      %p96 = por %p94, %p95
      %s98 = sadd.s32 %s97, 1
      %p101 = scmp.eq.s32.totalorder %s21, 1
      %p102 = scmp.ne.s32.totalorder %s97, %s99
      %p103 = scmp.eq.s32.totalorder %s21, 0
      %p104 = por %p102, %p103
      %p105 = scmp.ne.s32.totalorder %s97, %s99
      %p106 = scmp.eq.s32.totalorder %s26, 1
      %p107 = por %p105, %p106
      %p108 = scmp.ne.s32.totalorder %s99, %s100
      %p109 = scmp.eq.s32.totalorder %s26, 0
      %p110 = por %p108, %p109
      %p111 = scmp.ne.s32.totalorder %s99, %s100
      %p112 = scmp.eq.s32.totalorder %s27, 1
      %p113 = por %p111, %p112
      %p115 = scmp.ne.s32.totalorder %s100, %s114
      %p116 = scmp.eq.s32.totalorder %s27, 0
      %p117 = por %p115, %p116
      %s118 = ssub.s32 %s21, %s28
      %p119 = scmp.eq.s32.totalorder %s118, 0
      %s121 = sadd.s32 %s120, 1
      %s122 = scalar_select %p119, %s120, %s121
      %p125 = pneg %p119
      %p126 = scmp.eq.s32.totalorder %s21, 1
      %p127 = por %p125, %p126
      %p128 = scmp.ne.s32.totalorder %s120, %s123
      %p129 = scmp.eq.s32.totalorder %s21, 0
      %p130 = por %p128, %p129
      %p131 = scmp.ne.s32.totalorder %s120, %s123
      %p132 = scmp.eq.s32.totalorder %s26, 1
      %p133 = por %p131, %p132
      %p134 = scmp.ne.s32.totalorder %s123, %s124
      %p135 = scmp.eq.s32.totalorder %s26, 0
      %p136 = por %p134, %p135
      %p137 = scmp.ne.s32.totalorder %s123, %s124
      %p138 = scmp.eq.s32.totalorder %s27, 1
      %p139 = por %p137, %p138
      %p141 = scmp.ne.s32.totalorder %s124, %s140
      %p142 = scmp.eq.s32.totalorder %s27, 0
      %p143 = por %p141, %p142
      %s144 = ssub.s32 %s21, %s28
      %p145 = scmp.eq.s32.totalorder %s144, 0
      %s147 = sadd.s32 %s146, 1
      %s148 = scalar_select %p145, %s146, %s147
      %p151 = pneg %p145
      %p152 = scmp.eq.s32.totalorder %s21, 1
      %p153 = por %p151, %p152
      %p154 = scmp.ne.s32.totalorder %s146, %s149
      %p155 = scmp.eq.s32.totalorder %s21, 0
      %p156 = por %p154, %p155
      %p157 = scmp.ne.s32.totalorder %s146, %s149
      %p158 = scmp.eq.s32.totalorder %s26, 1
      %p159 = por %p157, %p158
      %p160 = scmp.ne.s32.totalorder %s149, %s150
      %p161 = scmp.eq.s32.totalorder %s26, 0
      %p162 = por %p160, %p161
      %p163 = scmp.ne.s32.totalorder %s149, %s150
      %p164 = scmp.eq.s32.totalorder %s27, 1
      %p165 = por %p163, %p164
      %p167 = scmp.ne.s32.totalorder %s150, %s166
      %p168 = scmp.eq.s32.totalorder %s27, 0
      %p169 = por %p167, %p168
      %p170 = scmp.le.s32.totalorder 1, %s21
      %p171 = scmp.lt.s32.totalorder %s21, 3
      %p172 = pnand %p170, %p171
      %p173 = pneg %p172
      // Predicated region
      $region9: #{tpu_custom_call.1} parent=5 // pred_check
        _
      $region10: #{tpu_custom_call.1} parent=5 // pred_check_branch
        %175 = sbr.rel (%p172) target = $region12
      $region11: #{tpu_custom_call.1} parent=5 // pred_region
        %s176 = ssub.s32 %s21, 1
        // Predicated region
        $region13: #{tpu_custom_call.1} parent=11 // pred_check
          %p177 = pneg %p68
        $region14: #{tpu_custom_call.1} parent=11 // pred_check_branch
          %179 = sbr.rel (%p177) target = $region16
        $region15: #{tpu_custom_call.1} parent=11 // pred_region
          _
        $region16: #{tpu_custom_call.1} parent=11 // pred_fallthru
          _
        // Predicated region
        $region17: #{tpu_custom_call.1} parent=11 // pred_check
          %p180 = pneg %p89
        $region18: #{tpu_custom_call.1} parent=11 // pred_check_branch
          %182 = sbr.rel (%p180) target = $region20
        $region19: #{tpu_custom_call.1} parent=11 // pred_region
          _
        $region20: #{tpu_custom_call.1} parent=11 // pred_fallthru
          _
        // Predicated region
        $region21: #{tpu_custom_call.1} parent=11 // pred_check
          %p183 = pneg %p110
        $region22: #{tpu_custom_call.1} parent=11 // pred_check_branch
          %185 = sbr.rel (%p183) target = $region24
        $region23: #{tpu_custom_call.1} parent=11 // pred_region
          _
        $region24: #{tpu_custom_call.1} parent=11 // pred_fallthru
          _
      $region12: #{tpu_custom_call.1} parent=5 // pred_fallthru
        _
      %p186 = scmp.lt.s32.totalorder %s21, 2
      // Predicated region
      $region25: #{tpu_custom_call.1} parent=5 // pred_check
        %p187 = pneg %p186
      $region26: #{tpu_custom_call.1} parent=5 // pred_check_branch
        %189 = sbr.rel (%p187) target = $region28
      $region27: #{tpu_custom_call.1} parent=5 // pred_region
        // Predicated region
        $region29: #{tpu_custom_call.1} parent=27 // pred_check
          %p190 = pneg %p41
        $region30: #{tpu_custom_call.1} parent=27 // pred_check_branch
          %192 = sbr.rel (%p190) target = $region32
        $region31: #{tpu_custom_call.1} parent=27 // pred_region
          %s193 = sand.u32 %s31, 1
          %s194 = scalar_lea.sflag [#allocation3], %s193
          %s195 = sand.u32 %s31, 1
          %s196 = smul.addr %s195, 128
          %s197 = scalar_lea.vmem [#allocation2], %s196
          %s198 = smul.u32 8, %s21
          %s200 = ssub.s32 2048, 2048
          %201 = vsyncadd %s194, %s200
          %s202 = smul.addr %s198, 2
          %s203 = smul.addr %s202, 128
          %s204 = scalar_lea.hbm %s0, %s203
          %s205 = sshll.u32 %s197, 4
          %s206 = int_to_ptr.vmem [resolvable:$true] %s205
          %211 = dma.hbm_to_vmem [thread:$0]  %s204, 2048, %s206, %s194, 128, 128, 8
        $region32: #{tpu_custom_call.1} parent=27 // pred_fallthru
          _
      $region28: #{tpu_custom_call.1} parent=5 // pred_fallthru
        _
      %p212 = scmp.le.s32.totalorder 1, %s21
      %p213 = scmp.lt.s32.totalorder %s21, 3
      %p214 = pnand %p212, %p213
      %p215 = pneg %p214
      // Predicated region
      $region33: #{tpu_custom_call.1} parent=5 // pred_check
        _
      $region34: #{tpu_custom_call.1} parent=5 // pred_check_branch
        %217 = sbr.rel (%p214) target = $region36
      $region35: #{tpu_custom_call.1} parent=5 // pred_region
        %s218 = ssub.s32 %s21, 1
        %s219 = sand.u32 %s34, 1
        %s220 = scalar_lea.sflag [#allocation3], %s219
        %s221 = sand.u32 %s34, 1
        %s222 = smul.addr %s221, 128
        %s223 = scalar_lea.vmem [#allocation2], %s222
        // Predicated region
        $region37: #{tpu_custom_call.1} parent=35 // pred_check
          %p224 = pneg %p47
        $region38: #{tpu_custom_call.1} parent=35 // pred_check_branch
          %226 = sbr.rel (%p224) target = $region40
        $region39: #{tpu_custom_call.1} parent=35 // pred_region
          %227 = dma.done %s220, 2048
        $region40: #{tpu_custom_call.1} parent=35 // pred_fallthru
          _
        %s228 = sand.u32 %s34, 1
        %s229 = scalar_lea.sflag [#allocation3], %s228
        %s230 = sand.u32 %s34, 1
        %s231 = smul.addr %s230, 128
        %s232 = scalar_lea.vmem [#allocation2], %s231
        %p233 = pneg %p47
        %p234 = pneg %p44
        %p235 = pneg %p68
        %p236 = pneg %p65
        %p237 = pneg %p89
        %p238 = pneg %p86
        %p239 = pneg %p110
        %p240 = pneg %p107
        %p241 = pneg %p136
        %p242 = pneg %p133
        %s243 = sand.u32 %s123, 1
        %s244 = scalar_lea.sflag [#allocation4], %s243
        %s245 = sand.u32 %s123, 1
        %s246 = smul.addr %s245, 8
        %s247 = scalar_lea.vmem [#allocation5], %s246
        %p248 = pneg %p162
        %p249 = pneg %p159
        %s250 = sand.u32 %s149, 1
        %s251 = scalar_lea.sflag [#allocation7], %s250
        %s252 = sand.u32 %s149, 1
        %s253 = smul.addr %s252, 8
        %s254 = scalar_lea.vmem [#allocation6], %s253
        %s255 = smul.u32 8, %s26
        %v256 = vld [vmem:[%s223] sm:$0xff]
        %v257 = vld [vmem:[%s223 + $0x8] sm:$0xff]
        %v258 = vld [vmem:[%s223 + $0x10] sm:$0xff]
        %v259 = vld [vmem:[%s223 + $0x18] sm:$0xff]
        %v260 = vld [vmem:[%s223 + $0x20] sm:$0xff]
        %v261 = vld [vmem:[%s223 + $0x28] sm:$0xff]
        %v262 = vld [vmem:[%s223 + $0x30] sm:$0xff]
        %v263 = vld [vmem:[%s223 + $0x38] sm:$0xff]
        %v264 = vld [vmem:[%s223 + $0x40] sm:$0xff]
        %v265 = vld [vmem:[%s223 + $0x48] sm:$0xff]
        %v266 = vld [vmem:[%s223 + $0x50] sm:$0xff]
        %v267 = vld [vmem:[%s223 + $0x58] sm:$0xff]
        %v268 = vld [vmem:[%s223 + $0x60] sm:$0xff]
        %v269 = vld [vmem:[%s223 + $0x68] sm:$0xff]
        %v270 = vld [vmem:[%s223 + $0x70] sm:$0xff]
        %v271 = vld [vmem:[%s223 + $0x78] sm:$0xff]
        %v272 = vld [vmem:[%s1] sm:$0xff]
        %v273 = vld [vmem:[%s1 + $0x8] sm:$0xff]
        %v274 = vld [vmem:[%s1 + $0x10] sm:$0xff]
        %v275 = vld [vmem:[%s1 + $0x18] sm:$0xff]
        %v276 = vld [vmem:[%s1 + $0x20] sm:$0xff]
        %v277 = vld [vmem:[%s1 + $0x28] sm:$0xff]
        %v278 = vld [vmem:[%s1 + $0x30] sm:$0xff]
        %v279 = vld [vmem:[%s1 + $0x38] sm:$0xff]
        %v280 = vld [vmem:[%s1 + $0x40] sm:$0xff]
        %v281 = vld [vmem:[%s1 + $0x48] sm:$0xff]
        %v282 = vld [vmem:[%s1 + $0x50] sm:$0xff]
        %v283 = vld [vmem:[%s1 + $0x58] sm:$0xff]
        %v284 = vld [vmem:[%s1 + $0x60] sm:$0xff]
        %v285 = vld [vmem:[%s1 + $0x68] sm:$0xff]
        %v286 = vld [vmem:[%s1 + $0x70] sm:$0xff]
        %v287 = vld [vmem:[%s1 + $0x78] sm:$0xff]
        %v288 = vld [vmem:[%s2] sm:$0x1]
        %v290 = vlaneseq
        %v291 = vshrl.u32 %v290, 7
        %v292 = vsub.s32 0, %v291
        %v293 = vrot.slane %v288, %v292
        %295 = vmatprep.subr.mxu0 0.0
        %296 = vmatpush1.msra.mxu0 %v272
        %297 = vmatprep.subr.mxu0 0.0
        %298 = vmatpush1.msra.mxu0 %v273
        %299 = vmatprep.subr.mxu0 0.0
        %300 = vmatpush1.msra.mxu0 %v274
        %301 = vmatprep.subr.mxu0 0.0
        %302 = vmatpush1.msra.mxu0 %v275
        %303 = vmatprep.subr.mxu0 0.0
        %304 = vmatpush1.msra.mxu0 %v276
        %305 = vmatprep.subr.mxu0 0.0
        %306 = vmatpush1.msra.mxu0 %v277
        %307 = vmatprep.subr.mxu0 0.0
        %308 = vmatpush1.msra.mxu0 %v278
        %309 = vmatprep.subr.mxu0 0.0
        %310 = vmatpush1.msra.mxu0 %v279
        %311 = vmatprep.subr.mxu0 0.0
        %312 = vmatpush1.msra.mxu0 %v280
        %313 = vmatprep.subr.mxu0 0.0
        %314 = vmatpush1.msra.mxu0 %v281
        %315 = vmatprep.subr.mxu0 0.0
        %316 = vmatpush1.msra.mxu0 %v282
        %317 = vmatprep.subr.mxu0 0.0
        %318 = vmatpush1.msra.mxu0 %v283
        %319 = vmatprep.subr.mxu0 0.0
        %320 = vmatpush1.msra.mxu0 %v284
        %321 = vmatprep.subr.mxu0 0.0
        %322 = vmatpush1.msra.mxu0 %v285
        %323 = vmatprep.subr.mxu0 0.0
        %324 = vmatpush1.msra.mxu0 %v286
        %325 = vmatprep.subr.mxu0 0.0
        %326 = vmatpush1.msra.mxu0 %v287
        %327 = vmatprep.subr.mxu0 0.0
        %328 = vmatpush1.msra.mxu0 0.0
        %329 = vmatprep.subr.mxu0 0.0
        %330 = vmatpush1.msra.mxu0 0.0
        %331 = vmatprep.subr.mxu0 0.0
        %332 = vmatpush1.msra.mxu0 0.0
        %333 = vmatprep.subr.mxu0 0.0
        %334 = vmatpush1.msra.mxu0 0.0
        %335 = vmatprep.subr.mxu0 0.0
        %336 = vmatpush1.msra.mxu0 0.0
        %337 = vmatprep.subr.mxu0 0.0
        %338 = vmatpush1.msra.mxu0 0.0
        %339 = vmatprep.subr.mxu0 0.0
        %340 = vmatpush1.msra.mxu0 0.0
        %341 = vmatprep.subr.mxu0 0.0
        %342 = vmatpush1.msra.mxu0 0.0
        %343 = vmatprep.subr.mxu0 0.0
        %344 = vmatpush1.msra.mxu0 0.0
        %345 = vmatprep.subr.mxu0 0.0
        %346 = vmatpush1.msra.mxu0 0.0
        %347 = vmatprep.subr.mxu0 0.0
        %348 = vmatpush1.msra.mxu0 0.0
        %349 = vmatprep.subr.mxu0 0.0
        %350 = vmatpush1.msra.mxu0 0.0
        %351 = vmatprep.subr.mxu0 0.0
        %352 = vmatpush1.msra.mxu0 0.0
        %353 = vmatprep.subr.mxu0 0.0
        %354 = vmatpush1.msra.mxu0 0.0
        %355 = vmatprep.subr.mxu0 0.0
        %356 = vmatpush1.msra.mxu0 0.0
        %357 = vmatprep.subr.mxu0 0.0
        %358 = vmatpush1.msra.mxu0 0.0
        %359 = vmatprep.mubr.f32.mxu0 0.0
        %360 = vmatmul.mubr.f32.gmra.mrb[0].mxu0 %v256
        %v361 = vpop.f32.mrb[0].mxu0
        %v362 = vadd.f32 %v293, %v361
        %v363 = vpop.f32.mrb[0].mxu0
        %364 = vmatprep.mubr.f32.mxu0 0.0
        %365 = vmatmul.mubr.f32.gmra.mrb[0].mxu0 %v257
        %v366 = vpop.f32.mrb[0].mxu0
        %v367 = vadd.f32 %v293, %v366
        %v368 = vpop.f32.mrb[0].mxu0
        %369 = vmatprep.mubr.f32.mxu0 0.0
        %370 = vmatmul.mubr.f32.gmra.mrb[0].mxu0 %v258
        %v371 = vpop.f32.mrb[0].mxu0
        %v372 = vadd.f32 %v293, %v371
        %v373 = vpop.f32.mrb[0].mxu0
        %374 = vmatprep.mubr.f32.mxu0 0.0
        %375 = vmatmul.mubr.f32.gmra.mrb[0].mxu0 %v259
        %v376 = vpop.f32.mrb[0].mxu0
        %v377 = vadd.f32 %v293, %v376
        %v378 = vpop.f32.mrb[0].mxu0
        %379 = vmatprep.mubr.f32.mxu0 0.0
        %380 = vmatmul.mubr.f32.gmra.mrb[0].mxu0 %v260
        %v381 = vpop.f32.mrb[0].mxu0
        %v382 = vadd.f32 %v293, %v381
        %v383 = vpop.f32.mrb[0].mxu0
        %384 = vmatprep.mubr.f32.mxu0 0.0
        %385 = vmatmul.mubr.f32.gmra.mrb[0].mxu0 %v261
        %v386 = vpop.f32.mrb[0].mxu0
        %v387 = vadd.f32 %v293, %v386
        %v388 = vpop.f32.mrb[0].mxu0
        %389 = vmatprep.mubr.f32.mxu0 0.0
        %390 = vmatmul.mubr.f32.gmra.mrb[0].mxu0 %v262
        %v391 = vpop.f32.mrb[0].mxu0
        %v392 = vadd.f32 %v293, %v391
        %v393 = vpop.f32.mrb[0].mxu0
        %394 = vmatprep.mubr.f32.mxu0 0.0
        %395 = vmatmul.mubr.f32.gmra.mrb[0].mxu0 %v263
        %v396 = vpop.f32.mrb[0].mxu0
        %v397 = vadd.f32 %v293, %v396
        %v398 = vpop.f32.mrb[0].mxu0
        %399 = vmatprep.mubr.f32.mxu0 0.0
        %400 = vmatmul.mubr.f32.gmra.mrb[0].mxu0 %v264
        %v401 = vpop.f32.mrb[0].mxu0
        %v402 = vadd.f32 %v293, %v401
        %v403 = vpop.f32.mrb[0].mxu0
        %404 = vmatprep.mubr.f32.mxu0 0.0
        %405 = vmatmul.mubr.f32.gmra.mrb[0].mxu0 %v265
        %v406 = vpop.f32.mrb[0].mxu0
        %v407 = vadd.f32 %v293, %v406
        %v408 = vpop.f32.mrb[0].mxu0
        %409 = vmatprep.mubr.f32.mxu0 0.0
        %410 = vmatmul.mubr.f32.gmra.mrb[0].mxu0 %v266
        %v411 = vpop.f32.mrb[0].mxu0
        %v412 = vadd.f32 %v293, %v411
        %v413 = vpop.f32.mrb[0].mxu0
        %414 = vmatprep.mubr.f32.mxu0 0.0
        %415 = vmatmul.mubr.f32.gmra.mrb[0].mxu0 %v267
        %v416 = vpop.f32.mrb[0].mxu0
        %v417 = vadd.f32 %v293, %v416
        %v418 = vpop.f32.mrb[0].mxu0
        %419 = vmatprep.mubr.f32.mxu0 0.0
        %420 = vmatmul.mubr.f32.gmra.mrb[0].mxu0 %v268
        %v421 = vpop.f32.mrb[0].mxu0
        %v422 = vadd.f32 %v293, %v421
        %v423 = vpop.f32.mrb[0].mxu0
        %424 = vmatprep.mubr.f32.mxu0 0.0
        %425 = vmatmul.mubr.f32.gmra.mrb[0].mxu0 %v269
        %v426 = vpop.f32.mrb[0].mxu0
        %v427 = vadd.f32 %v293, %v426
        %v428 = vpop.f32.mrb[0].mxu0
        %429 = vmatprep.mubr.f32.mxu0 0.0
        %430 = vmatmul.mubr.f32.gmra.mrb[0].mxu0 %v270
        %v431 = vpop.f32.mrb[0].mxu0
        %v432 = vadd.f32 %v293, %v431
        %v433 = vpop.f32.mrb[0].mxu0
        %434 = vmatprep.mubr.f32.mxu0 0.0
        %435 = vmatmul.mubr.f32.gmra.mrb[0].mxu0 %v271
        %v436 = vpop.f32.mrb[0].mxu0
        %v437 = vadd.f32 %v293, %v436
        %v438 = vpop.f32.mrb[0].mxu0
        %439 = vdwg.mxu0
        %v440 = vtanh.pop %v362
        %v441 = vtanh.pop %v367
        %v442 = vtanh.pop %v372
        %v443 = vtanh.pop %v377
        %v444 = vtanh.pop %v382
        %v445 = vtanh.pop %v387
        %v446 = vtanh.pop %v392
        %v447 = vtanh.pop %v397
        %v448 = vtanh.pop %v402
        %v449 = vtanh.pop %v407
        %v450 = vtanh.pop %v412
        %v451 = vtanh.pop %v417
        %v452 = vtanh.pop %v422
        %v453 = vtanh.pop %v427
        %v454 = vtanh.pop %v432
        %v455 = vtanh.pop %v437
        %v456 = vld [vmem:[%s3] sm:$0x1]
        %v458 = vlaneseq
        %v459 = vshrl.u32 %v458, 7
        %v460 = vsub.s32 0, %v459
        %v461 = vrot.slane %v456, %v460
        %v463 = vmul.f32 %v440, %v461
        %v464 = vmul.f32 %v441, %v461
        %v465 = vmul.f32 %v442, %v461
        %v466 = vmul.f32 %v443, %v461
        %v467 = vmul.f32 %v444, %v461
        %v468 = vmul.f32 %v445, %v461
        %v469 = vmul.f32 %v446, %v461
        %v470 = vmul.f32 %v447, %v461
        %v471 = vmul.f32 %v448, %v461
        %v472 = vmul.f32 %v449, %v461
        %v473 = vmul.f32 %v450, %v461
        %v474 = vmul.f32 %v451, %v461
        %v475 = vmul.f32 %v452, %v461
        %v476 = vmul.f32 %v453, %v461
        %v477 = vmul.f32 %v454, %v461
        %v478 = vmul.f32 %v455, %v461
        %vm479 = vcmask 523264
        %v480 = vsel %vm479, %v463, 0.0
        %481 = vadd.xlane.f32.xlu0 %v480
        %v482 = vpop.xlane.xlu0 %481
        %v483 = vsel %vm479, %v464, 0.0
        %484 = vadd.xlane.f32.xlu0 %v483
        %v485 = vpop.xlane.xlu0 %484
        %v486 = vsel %vm479, %v465, 0.0
        %487 = vadd.xlane.f32.xlu0 %v486
        %v488 = vpop.xlane.xlu0 %487
        %v489 = vsel %vm479, %v466, 0.0
        %490 = vadd.xlane.f32.xlu0 %v489
        %v491 = vpop.xlane.xlu0 %490
        %v492 = vsel %vm479, %v467, 0.0
        %493 = vadd.xlane.f32.xlu0 %v492
        %v494 = vpop.xlane.xlu0 %493
        %v495 = vsel %vm479, %v468, 0.0
        %496 = vadd.xlane.f32.xlu0 %v495
        %v497 = vpop.xlane.xlu0 %496
        %v498 = vsel %vm479, %v469, 0.0
        %499 = vadd.xlane.f32.xlu0 %v498
        %v500 = vpop.xlane.xlu0 %499
        %v501 = vsel %vm479, %v470, 0.0
        %502 = vadd.xlane.f32.xlu0 %v501
        %v503 = vpop.xlane.xlu0 %502
        %v504 = vsel %vm479, %v471, 0.0
        %505 = vadd.xlane.f32.xlu0 %v504
        %v506 = vpop.xlane.xlu0 %505
        %v507 = vsel %vm479, %v472, 0.0
        %508 = vadd.xlane.f32.xlu0 %v507
        %v509 = vpop.xlane.xlu0 %508
        %v510 = vsel %vm479, %v473, 0.0
        %511 = vadd.xlane.f32.xlu0 %v510
        %v512 = vpop.xlane.xlu0 %511
        %v513 = vsel %vm479, %v474, 0.0
        %514 = vadd.xlane.f32.xlu0 %v513
        %v515 = vpop.xlane.xlu0 %514
        %v516 = vsel %vm479, %v475, 0.0
        %517 = vadd.xlane.f32.xlu0 %v516
        %v518 = vpop.xlane.xlu0 %517
        %v519 = vsel %vm479, %v476, 0.0
        %520 = vadd.xlane.f32.xlu0 %v519
        %v521 = vpop.xlane.xlu0 %520
        %v522 = vsel %vm479, %v477, 0.0
        %523 = vadd.xlane.f32.xlu0 %v522
        %v524 = vpop.xlane.xlu0 %523
        %v525 = vsel %vm479, %v478, 0.0
        %526 = vadd.xlane.f32.xlu0 %v525
        %v527 = vpop.xlane.xlu0 %526
        %v544 = vlaneseq
        %v545 = vand.u32 %v544, 127
        %v546 = vlaneseq
        %v547 = vshrl.u32 %v546, 7
        %v548 = vsub.s32 %v545, %v547
        %v549 = vrot.slane %v482, %v548
        %v550 = vadd.s32 %v545, 4294967288
        %v551 = vlaneseq
        %v552 = vshrl.u32 %v551, 7
        %v553 = vsub.s32 %v550, %v552
        %v554 = vrot.slane %v485, %v553
        %vm555 = vcmask 130112
        %v556 = vsel %vm555, %v554, %v549
        %v557 = vlaneseq
        %v558 = vshrl.u32 %v557, 7
        %v559 = vsub.s32 %v545, %v558
        %v560 = vrot.slane %v488, %v559
        %v561 = vlaneseq
        %v562 = vshrl.u32 %v561, 7
        %v563 = vsub.s32 %v550, %v562
        %v564 = vrot.slane %v491, %v563
        %v565 = vsel %vm555, %v564, %v560
        %v566 = vlaneseq
        %v567 = vshrl.u32 %v566, 7
        %v568 = vsub.s32 %v545, %v567
        %v569 = vrot.slane %v494, %v568
        %v570 = vlaneseq
        %v571 = vshrl.u32 %v570, 7
        %v572 = vsub.s32 %v550, %v571
        %v573 = vrot.slane %v497, %v572
        %v574 = vsel %vm555, %v573, %v569
        %v575 = vlaneseq
        %v576 = vshrl.u32 %v575, 7
        %v577 = vsub.s32 %v545, %v576
        %v578 = vrot.slane %v500, %v577
        %v579 = vlaneseq
        %v580 = vshrl.u32 %v579, 7
        %v581 = vsub.s32 %v550, %v580
        %v582 = vrot.slane %v503, %v581
        %v583 = vsel %vm555, %v582, %v578
        %v584 = vlaneseq
        %v585 = vshrl.u32 %v584, 7
        %v586 = vsub.s32 %v545, %v585
        %v587 = vrot.slane %v506, %v586
        %v588 = vlaneseq
        %v589 = vshrl.u32 %v588, 7
        %v590 = vsub.s32 %v550, %v589
        %v591 = vrot.slane %v509, %v590
        %v592 = vsel %vm555, %v591, %v587
        %v593 = vlaneseq
        %v594 = vshrl.u32 %v593, 7
        %v595 = vsub.s32 %v545, %v594
        %v596 = vrot.slane %v512, %v595
        %v597 = vlaneseq
        %v598 = vshrl.u32 %v597, 7
        %v599 = vsub.s32 %v550, %v598
        %v600 = vrot.slane %v515, %v599
        %v601 = vsel %vm555, %v600, %v596
        %v602 = vlaneseq
        %v603 = vshrl.u32 %v602, 7
        %v604 = vsub.s32 %v545, %v603
        %v605 = vrot.slane %v518, %v604
        %v606 = vlaneseq
        %v607 = vshrl.u32 %v606, 7
        %v608 = vsub.s32 %v550, %v607
        %v609 = vrot.slane %v521, %v608
        %v610 = vsel %vm555, %v609, %v605
        %v611 = vlaneseq
        %v612 = vshrl.u32 %v611, 7
        %v613 = vsub.s32 %v545, %v612
        %v614 = vrot.slane %v524, %v613
        %v615 = vlaneseq
        %v616 = vshrl.u32 %v615, 7
        %v617 = vsub.s32 %v550, %v616
        %v618 = vrot.slane %v527, %v617
        %v619 = vsel %vm555, %v618, %v614
        %vm620 = vcmask 1041409
        %v621 = vsel %vm620, %v565, %v556
        %vm622 = vcmask 1042434
        %v623 = vsel %vm622, %v574, %v621
        %vm624 = vcmask 1043459
        %v625 = vsel %vm624, %v583, %v623
        %vm626 = vcmask 1044484
        %v627 = vsel %vm626, %v592, %v625
        %vm628 = vcmask 1045509
        %v629 = vsel %vm628, %v601, %v627
        %vm630 = vcmask 1046534
        %v631 = vsel %vm630, %v610, %v629
        %vm632 = vcmask 1047559
        %v633 = vsel %vm632, %v619, %v631
        %vm635 = vcmask 130048
        %v636 = vsel %vm635, %v633, -inf
        %637 = vmax.xlane.f32.xlu0 %v636
        %v638 = vpop.xlane.xlu0 %637
        %v640 = vlaneseq
        %v641 = vshrl.u32 %v640, 7
        %v642 = vsub.s32 0, %v641
        %v643 = vrot.slane %v638, %v642
        %v644 = vlaneseq
        %v645 = vshrl.u32 %v644, 7
        %v646 = vsub.s32 1, %v645
        %v647 = vrot.slane %v638, %v646
        %v648 = vlaneseq
        %v649 = vshrl.u32 %v648, 7
        %v650 = vsub.s32 2, %v649
        %v651 = vrot.slane %v638, %v650
        %v652 = vlaneseq
        %v653 = vshrl.u32 %v652, 7
        %v654 = vsub.s32 3, %v653
        %v655 = vrot.slane %v638, %v654
        %v656 = vlaneseq
        %v657 = vshrl.u32 %v656, 7
        %v658 = vsub.s32 4, %v657
        %v659 = vrot.slane %v638, %v658
        %v660 = vlaneseq
        %v661 = vshrl.u32 %v660, 7
        %v662 = vsub.s32 5, %v661
        %v663 = vrot.slane %v638, %v662
        %v664 = vlaneseq
        %v665 = vshrl.u32 %v664, 7
        %v666 = vsub.s32 6, %v665
        %v667 = vrot.slane %v638, %v666
        %v668 = vlaneseq
        %v669 = vshrl.u32 %v668, 7
        %v670 = vsub.s32 7, %v669
        %v671 = vrot.slane %v638, %v670
        %v680 = vsub.f32 %v482, %v643
        %v681 = vsub.f32 %v485, %v643
        %v682 = vsub.f32 %v488, %v647
        %v683 = vsub.f32 %v491, %v647
        %v684 = vsub.f32 %v494, %v651
        %v685 = vsub.f32 %v497, %v651
        %v686 = vsub.f32 %v500, %v655
        %v687 = vsub.f32 %v503, %v655
        %v688 = vsub.f32 %v506, %v659
        %v689 = vsub.f32 %v509, %v659
        %v690 = vsub.f32 %v512, %v663
        %v691 = vsub.f32 %v515, %v663
        %v692 = vsub.f32 %v518, %v667
        %v693 = vsub.f32 %v521, %v667
        %v694 = vsub.f32 %v524, %v671
        %v695 = vsub.f32 %v527, %v671
        %v696 = vmul.f32 %v680, 1.442695
        %v697 = vpow.pop %v696
        %v698 = vmul.f32 %v681, 1.442695
        %v699 = vpow.pop %v698
        %v700 = vmul.f32 %v682, 1.442695
        %v701 = vpow.pop %v700
        %v702 = vmul.f32 %v683, 1.442695
        %v703 = vpow.pop %v702
        %v704 = vmul.f32 %v684, 1.442695
        %v705 = vpow.pop %v704
        %v706 = vmul.f32 %v685, 1.442695
        %v707 = vpow.pop %v706
        %v708 = vmul.f32 %v686, 1.442695
        %v709 = vpow.pop %v708
        %v710 = vmul.f32 %v687, 1.442695
        %v711 = vpow.pop %v710
        %v712 = vmul.f32 %v688, 1.442695
        %v713 = vpow.pop %v712
        %v714 = vmul.f32 %v689, 1.442695
        %v715 = vpow.pop %v714
        %v716 = vmul.f32 %v690, 1.442695
        %v717 = vpow.pop %v716
        %v718 = vmul.f32 %v691, 1.442695
        %v719 = vpow.pop %v718
        %v720 = vmul.f32 %v692, 1.442695
        %v721 = vpow.pop %v720
        %v722 = vmul.f32 %v693, 1.442695
        %v723 = vpow.pop %v722
        %v724 = vmul.f32 %v694, 1.442695
        %v725 = vpow.pop %v724
        %v726 = vmul.f32 %v695, 1.442695
        %v727 = vpow.pop %v726
        %744 = vset.pattern.permute.xlu0 0
        %745 = vperm.xlu0 %744, %v697
        %v746 = vpop.permute.xlu0 %745
        %747 = vset.pattern.permute.xlu0 0
        %748 = vperm.xlu0 %747, %v699
        %v749 = vpop.permute.xlu0 %748
        %750 = vset.pattern.permute.xlu0 0
        %751 = vperm.xlu0 %750, %v701
        %v752 = vpop.permute.xlu0 %751
        %753 = vset.pattern.permute.xlu0 0
        %754 = vperm.xlu0 %753, %v703
        %v755 = vpop.permute.xlu0 %754
        %756 = vset.pattern.permute.xlu0 0
        %757 = vperm.xlu0 %756, %v705
        %v758 = vpop.permute.xlu0 %757
        %759 = vset.pattern.permute.xlu0 0
        %760 = vperm.xlu0 %759, %v707
        %v761 = vpop.permute.xlu0 %760
        %762 = vset.pattern.permute.xlu0 0
        %763 = vperm.xlu0 %762, %v709
        %v764 = vpop.permute.xlu0 %763
        %765 = vset.pattern.permute.xlu0 0
        %766 = vperm.xlu0 %765, %v711
        %v767 = vpop.permute.xlu0 %766
        %768 = vset.pattern.permute.xlu0 0
        %769 = vperm.xlu0 %768, %v713
        %v770 = vpop.permute.xlu0 %769
        %771 = vset.pattern.permute.xlu0 0
        %772 = vperm.xlu0 %771, %v715
        %v773 = vpop.permute.xlu0 %772
        %774 = vset.pattern.permute.xlu0 0
        %775 = vperm.xlu0 %774, %v717
        %v776 = vpop.permute.xlu0 %775
        %777 = vset.pattern.permute.xlu0 0
        %778 = vperm.xlu0 %777, %v719
        %v779 = vpop.permute.xlu0 %778
        %780 = vset.pattern.permute.xlu0 0
        %781 = vperm.xlu0 %780, %v721
        %v782 = vpop.permute.xlu0 %781
        %783 = vset.pattern.permute.xlu0 0
        %784 = vperm.xlu0 %783, %v723
        %v785 = vpop.permute.xlu0 %784
        %786 = vset.pattern.permute.xlu0 0
        %787 = vperm.xlu0 %786, %v725
        %v788 = vpop.permute.xlu0 %787
        %789 = vset.pattern.permute.xlu0 0
        %790 = vperm.xlu0 %789, %v727
        %v791 = vpop.permute.xlu0 %790
        %v792 = vlaneseq
        %v793 = vshrl.u32 %v792, 7
        %v794 = vsub.s32 %v545, %v793
        %v795 = vrot.slane %v746, %v794
        %v796 = vlaneseq
        %v797 = vshrl.u32 %v796, 7
        %v798 = vsub.s32 %v550, %v797
        %v799 = vrot.slane %v749, %v798
        %v800 = vsel %vm555, %v799, %v795
        %v801 = vlaneseq
        %v802 = vshrl.u32 %v801, 7
        %v803 = vsub.s32 %v545, %v802
        %v804 = vrot.slane %v752, %v803
        %v805 = vlaneseq
        %v806 = vshrl.u32 %v805, 7
        %v807 = vsub.s32 %v550, %v806
        %v808 = vrot.slane %v755, %v807
        %v809 = vsel %vm555, %v808, %v804
        %v810 = vlaneseq
        %v811 = vshrl.u32 %v810, 7
        %v812 = vsub.s32 %v545, %v811
        %v813 = vrot.slane %v758, %v812
        %v814 = vlaneseq
        %v815 = vshrl.u32 %v814, 7
        %v816 = vsub.s32 %v550, %v815
        %v817 = vrot.slane %v761, %v816
        %v818 = vsel %vm555, %v817, %v813
        %v819 = vlaneseq
        %v820 = vshrl.u32 %v819, 7
        %v821 = vsub.s32 %v545, %v820
        %v822 = vrot.slane %v764, %v821
        %v823 = vlaneseq
        %v824 = vshrl.u32 %v823, 7
        %v825 = vsub.s32 %v550, %v824
        %v826 = vrot.slane %v767, %v825
        %v827 = vsel %vm555, %v826, %v822
        %v828 = vlaneseq
        %v829 = vshrl.u32 %v828, 7
        %v830 = vsub.s32 %v545, %v829
        %v831 = vrot.slane %v770, %v830
        %v832 = vlaneseq
        %v833 = vshrl.u32 %v832, 7
        %v834 = vsub.s32 %v550, %v833
        %v835 = vrot.slane %v773, %v834
        %v836 = vsel %vm555, %v835, %v831
        %v837 = vlaneseq
        %v838 = vshrl.u32 %v837, 7
        %v839 = vsub.s32 %v545, %v838
        %v840 = vrot.slane %v776, %v839
        %v841 = vlaneseq
        %v842 = vshrl.u32 %v841, 7
        %v843 = vsub.s32 %v550, %v842
        %v844 = vrot.slane %v779, %v843
        %v845 = vsel %vm555, %v844, %v840
        %v846 = vlaneseq
        %v847 = vshrl.u32 %v846, 7
        %v848 = vsub.s32 %v545, %v847
        %v849 = vrot.slane %v782, %v848
        %v850 = vlaneseq
        %v851 = vshrl.u32 %v850, 7
        %v852 = vsub.s32 %v550, %v851
        %v853 = vrot.slane %v785, %v852
        %v854 = vsel %vm555, %v853, %v849
        %v855 = vlaneseq
        %v856 = vshrl.u32 %v855, 7
        %v857 = vsub.s32 %v545, %v856
        %v858 = vrot.slane %v788, %v857
        %v859 = vlaneseq
        %v860 = vshrl.u32 %v859, 7
        %v861 = vsub.s32 %v550, %v860
        %v862 = vrot.slane %v791, %v861
        %v863 = vsel %vm555, %v862, %v858
        %v864 = vsel %vm620, %v809, %v800
        %v865 = vsel %vm622, %v818, %v864
        %v866 = vsel %vm624, %v827, %v865
        %v867 = vsel %vm626, %v836, %v866
        %v868 = vsel %vm628, %v845, %v867
        %v869 = vsel %vm630, %v854, %v868
        %v870 = vsel %vm632, %v863, %v869
        %v872 = vsel %vm635, %v870, 0.0
        %873 = vadd.xlane.f32.xlu0 %v872
        %v874 = vpop.xlane.xlu0 %873
        %v875 = vrcp.pop %v874
        %v877 = vlaneseq
        %v878 = vshrl.u32 %v877, 7
        %v879 = vsub.s32 0, %v878
        %v880 = vrot.slane %v875, %v879
        %v881 = vlaneseq
        %v882 = vshrl.u32 %v881, 7
        %v883 = vsub.s32 1, %v882
        %v884 = vrot.slane %v875, %v883
        %v885 = vlaneseq
        %v886 = vshrl.u32 %v885, 7
        %v887 = vsub.s32 2, %v886
        %v888 = vrot.slane %v875, %v887
        %v889 = vlaneseq
        %v890 = vshrl.u32 %v889, 7
        %v891 = vsub.s32 3, %v890
        %v892 = vrot.slane %v875, %v891
        %v893 = vlaneseq
        %v894 = vshrl.u32 %v893, 7
        %v895 = vsub.s32 4, %v894
        %v896 = vrot.slane %v875, %v895
        %v897 = vlaneseq
        %v898 = vshrl.u32 %v897, 7
        %v899 = vsub.s32 5, %v898
        %v900 = vrot.slane %v875, %v899
        %v901 = vlaneseq
        %v902 = vshrl.u32 %v901, 7
        %v903 = vsub.s32 6, %v902
        %v904 = vrot.slane %v875, %v903
        %v905 = vlaneseq
        %v906 = vshrl.u32 %v905, 7
        %v907 = vsub.s32 7, %v906
        %v908 = vrot.slane %v875, %v907
        %v917 = vmul.f32 %v697, %v880
        %v918 = vmul.f32 %v699, %v880
        %v919 = vmul.f32 %v701, %v884
        %v920 = vmul.f32 %v703, %v884
        %v921 = vmul.f32 %v705, %v888
        %v922 = vmul.f32 %v707, %v888
        %v923 = vmul.f32 %v709, %v892
        %v924 = vmul.f32 %v711, %v892
        %v925 = vmul.f32 %v713, %v896
        %v926 = vmul.f32 %v715, %v896
        %v927 = vmul.f32 %v717, %v900
        %v928 = vmul.f32 %v719, %v900
        %v929 = vmul.f32 %v721, %v904
        %v930 = vmul.f32 %v723, %v904
        %v931 = vmul.f32 %v725, %v908
        %v932 = vmul.f32 %v727, %v908
        %934 = vset.pattern.permute.xlu0 0
        %935 = vperm.xlu0 %934, %v917
        %v936 = vpop.permute.xlu0 %935
        %939 = vset.pattern.permute.xlu0 0
        %940 = vperm.xlu0 %939, %v918
        %v941 = vpop.permute.xlu0 %940
        %944 = vset.pattern.permute.xlu0 0
        %945 = vperm.xlu0 %944, %v919
        %v946 = vpop.permute.xlu0 %945
        %949 = vset.pattern.permute.xlu0 0
        %950 = vperm.xlu0 %949, %v920
        %v951 = vpop.permute.xlu0 %950
        %954 = vset.pattern.permute.xlu0 0
        %955 = vperm.xlu0 %954, %v921
        %v956 = vpop.permute.xlu0 %955
        %959 = vset.pattern.permute.xlu0 0
        %960 = vperm.xlu0 %959, %v922
        %v961 = vpop.permute.xlu0 %960
        %964 = vset.pattern.permute.xlu0 0
        %965 = vperm.xlu0 %964, %v923
        %v966 = vpop.permute.xlu0 %965
        %969 = vset.pattern.permute.xlu0 0
        %970 = vperm.xlu0 %969, %v924
        %v971 = vpop.permute.xlu0 %970
        %974 = vset.pattern.permute.xlu0 0
        %975 = vperm.xlu0 %974, %v925
        %v976 = vpop.permute.xlu0 %975
        %979 = vset.pattern.permute.xlu0 0
        %980 = vperm.xlu0 %979, %v926
        %v981 = vpop.permute.xlu0 %980
        %984 = vset.pattern.permute.xlu0 0
        %985 = vperm.xlu0 %984, %v927
        %v986 = vpop.permute.xlu0 %985
        %989 = vset.pattern.permute.xlu0 0
        %990 = vperm.xlu0 %989, %v928
        %v991 = vpop.permute.xlu0 %990
        %994 = vset.pattern.permute.xlu0 0
        %995 = vperm.xlu0 %994, %v929
        %v996 = vpop.permute.xlu0 %995
        %999 = vset.pattern.permute.xlu0 0
        %1000 = vperm.xlu0 %999, %v930
        %v1001 = vpop.permute.xlu0 %1000
        %1004 = vset.pattern.permute.xlu0 0
        %1005 = vperm.xlu0 %1004, %v931
        %v1006 = vpop.permute.xlu0 %1005
        %1009 = vset.pattern.permute.xlu0 0
        %1010 = vperm.xlu0 %1009, %v932
        %v1011 = vpop.permute.xlu0 %1010
        %v1013 = vmul.f32 %v936, %v256
        %v1014 = vmul.f32 %v941, %v257
        %v1015 = vmul.f32 %v946, %v258
        %v1016 = vmul.f32 %v951, %v259
        %v1017 = vmul.f32 %v956, %v260
        %v1018 = vmul.f32 %v961, %v261
        %v1019 = vmul.f32 %v966, %v262
        %v1020 = vmul.f32 %v971, %v263
        %v1021 = vmul.f32 %v976, %v264
        %v1022 = vmul.f32 %v981, %v265
        %v1023 = vmul.f32 %v986, %v266
        %v1024 = vmul.f32 %v991, %v267
        %v1025 = vmul.f32 %v996, %v268
        %v1026 = vmul.f32 %v1001, %v269
        %v1027 = vmul.f32 %v1006, %v270
        %v1028 = vmul.f32 %v1011, %v271
        %v1029 = vadd.f32 %v1013, %v1014
        %v1030 = vrot.slane %v1029, 4
        %v1031 = vadd.f32 %v1029, %v1030
        %v1032 = vrot.slane %v1031, 2
        %v1033 = vadd.f32 %v1031, %v1032
        %v1034 = vrot.slane %v1033, 1
        %v1035 = vadd.f32 %v1033, %v1034
        %v1036 = vadd.f32 %v1015, %v1016
        %v1037 = vrot.slane %v1036, 4
        %v1038 = vadd.f32 %v1036, %v1037
        %v1039 = vrot.slane %v1038, 2
        %v1040 = vadd.f32 %v1038, %v1039
        %v1041 = vrot.slane %v1040, 1
        %v1042 = vadd.f32 %v1040, %v1041
        %v1043 = vadd.f32 %v1017, %v1018
        %v1044 = vrot.slane %v1043, 4
        %v1045 = vadd.f32 %v1043, %v1044
        %v1046 = vrot.slane %v1045, 2
        %v1047 = vadd.f32 %v1045, %v1046
        %v1048 = vrot.slane %v1047, 1
        %v1049 = vadd.f32 %v1047, %v1048
        %v1050 = vadd.f32 %v1019, %v1020
        %v1051 = vrot.slane %v1050, 4
        %v1052 = vadd.f32 %v1050, %v1051
        %v1053 = vrot.slane %v1052, 2
        %v1054 = vadd.f32 %v1052, %v1053
        %v1055 = vrot.slane %v1054, 1
        %v1056 = vadd.f32 %v1054, %v1055
        %v1057 = vadd.f32 %v1021, %v1022
        %v1058 = vrot.slane %v1057, 4
        %v1059 = vadd.f32 %v1057, %v1058
        %v1060 = vrot.slane %v1059, 2
        %v1061 = vadd.f32 %v1059, %v1060
        %v1062 = vrot.slane %v1061, 1
        %v1063 = vadd.f32 %v1061, %v1062
        %v1064 = vadd.f32 %v1023, %v1024
        %v1065 = vrot.slane %v1064, 4
        %v1066 = vadd.f32 %v1064, %v1065
        %v1067 = vrot.slane %v1066, 2
        %v1068 = vadd.f32 %v1066, %v1067
        %v1069 = vrot.slane %v1068, 1
        %v1070 = vadd.f32 %v1068, %v1069
        %v1071 = vadd.f32 %v1025, %v1026
        %v1072 = vrot.slane %v1071, 4
        %v1073 = vadd.f32 %v1071, %v1072
        %v1074 = vrot.slane %v1073, 2
        %v1075 = vadd.f32 %v1073, %v1074
        %v1076 = vrot.slane %v1075, 1
        %v1077 = vadd.f32 %v1075, %v1076
        %v1078 = vadd.f32 %v1027, %v1028
        %v1079 = vrot.slane %v1078, 4
        %v1080 = vadd.f32 %v1078, %v1079
        %v1081 = vrot.slane %v1080, 2
        %v1082 = vadd.f32 %v1080, %v1081
        %v1083 = vrot.slane %v1082, 1
        %v1084 = vadd.f32 %v1082, %v1083
        %v1093 = vsel %vm620, %v1042, %v1035
        %v1094 = vsel %vm622, %v1049, %v1093
        %v1095 = vsel %vm624, %v1056, %v1094
        %v1096 = vsel %vm626, %v1063, %v1095
        %v1097 = vsel %vm628, %v1070, %v1096
        %v1098 = vsel %vm630, %v1077, %v1097
        %v1099 = vsel %vm632, %v1084, %v1098
        %1101 = vst [vmem:[%s247] sm:$0xff] %v1099
        %v1102 = vlaneseq
        %v1103 = vshrl.u32 %v1102, 7
        %v1104 = vsub.s32 %v545, %v1103
        %v1105 = vrot.slane %v936, %v1104
        %v1106 = vlaneseq
        %v1107 = vshrl.u32 %v1106, 7
        %v1108 = vsub.s32 %v550, %v1107
        %v1109 = vrot.slane %v941, %v1108
        %v1110 = vsel %vm555, %v1109, %v1105
        %v1111 = vlaneseq
        %v1112 = vshrl.u32 %v1111, 7
        %v1113 = vsub.s32 %v545, %v1112
        %v1114 = vrot.slane %v946, %v1113
        %v1115 = vlaneseq
        %v1116 = vshrl.u32 %v1115, 7
        %v1117 = vsub.s32 %v550, %v1116
        %v1118 = vrot.slane %v951, %v1117
        %v1119 = vsel %vm555, %v1118, %v1114
        %v1120 = vlaneseq
        %v1121 = vshrl.u32 %v1120, 7
        %v1122 = vsub.s32 %v545, %v1121
        %v1123 = vrot.slane %v956, %v1122
        %v1124 = vlaneseq
        %v1125 = vshrl.u32 %v1124, 7
        %v1126 = vsub.s32 %v550, %v1125
        %v1127 = vrot.slane %v961, %v1126
        %v1128 = vsel %vm555, %v1127, %v1123
        %v1129 = vlaneseq
        %v1130 = vshrl.u32 %v1129, 7
        %v1131 = vsub.s32 %v545, %v1130
        %v1132 = vrot.slane %v966, %v1131
        %v1133 = vlaneseq
        %v1134 = vshrl.u32 %v1133, 7
        %v1135 = vsub.s32 %v550, %v1134
        %v1136 = vrot.slane %v971, %v1135
        %v1137 = vsel %vm555, %v1136, %v1132
        %v1138 = vlaneseq
        %v1139 = vshrl.u32 %v1138, 7
        %v1140 = vsub.s32 %v545, %v1139
        %v1141 = vrot.slane %v976, %v1140
        %v1142 = vlaneseq
        %v1143 = vshrl.u32 %v1142, 7
        %v1144 = vsub.s32 %v550, %v1143
        %v1145 = vrot.slane %v981, %v1144
        %v1146 = vsel %vm555, %v1145, %v1141
        %v1147 = vlaneseq
        %v1148 = vshrl.u32 %v1147, 7
        %v1149 = vsub.s32 %v545, %v1148
        %v1150 = vrot.slane %v986, %v1149
        %v1151 = vlaneseq
        %v1152 = vshrl.u32 %v1151, 7
        %v1153 = vsub.s32 %v550, %v1152
        %v1154 = vrot.slane %v991, %v1153
        %v1155 = vsel %vm555, %v1154, %v1150
        %v1156 = vlaneseq
        %v1157 = vshrl.u32 %v1156, 7
        %v1158 = vsub.s32 %v545, %v1157
        %v1159 = vrot.slane %v996, %v1158
        %v1160 = vlaneseq
        %v1161 = vshrl.u32 %v1160, 7
        %v1162 = vsub.s32 %v550, %v1161
        %v1163 = vrot.slane %v1001, %v1162
        %v1164 = vsel %vm555, %v1163, %v1159
        %v1165 = vlaneseq
        %v1166 = vshrl.u32 %v1165, 7
        %v1167 = vsub.s32 %v545, %v1166
        %v1168 = vrot.slane %v1006, %v1167
        %v1169 = vlaneseq
        %v1170 = vshrl.u32 %v1169, 7
        %v1171 = vsub.s32 %v550, %v1170
        %v1172 = vrot.slane %v1011, %v1171
        %v1173 = vsel %vm555, %v1172, %v1168
        %v1174 = vsel %vm620, %v1119, %v1110
        %v1175 = vsel %vm622, %v1128, %v1174
        %v1176 = vsel %vm624, %v1137, %v1175
        %v1177 = vsel %vm626, %v1146, %v1176
        %v1178 = vsel %vm628, %v1155, %v1177
        %v1179 = vsel %vm630, %v1164, %v1178
        %v1180 = vsel %vm632, %v1173, %v1179
        %1182 = vst.msk [vmem:[%s254] sm:$0xff] %vm635, %v1180
        %s1183 = sand.u32 %s123, 1
        %s1184 = scalar_lea.sflag [#allocation4], %s1183
        %s1185 = sand.u32 %s123, 1
        %s1186 = smul.addr %s1185, 8
        %s1187 = scalar_lea.vmem [#allocation5], %s1186
        %s1188 = sand.u32 %s149, 1
        %s1189 = scalar_lea.sflag [#allocation7], %s1188
        %s1190 = sand.u32 %s149, 1
        %s1191 = smul.addr %s1190, 8
        %s1192 = scalar_lea.vmem [#allocation6], %s1191
        // Predicated region
        $region41: #{tpu_custom_call.1} parent=35 // pred_check
          %p1193 = pneg %p133
        $region42: #{tpu_custom_call.1} parent=35 // pred_check_branch
          %1195 = sbr.rel (%p1193) target = $region44
        $region43: #{tpu_custom_call.1} parent=35 // pred_region
          %s1197 = ssub.s32 128, 128
          %1198 = vsyncadd %s1184, %s1197
          %s1199 = smul.addr %s26, 128
          %s1200 = scalar_lea.hbm %s4, %s1199
          %s1202 = sshll.u32 %s1187, 4
          %s1203 = int_to_ptr.vmem [resolvable:$true] %s1202
          %1205 = dma.vmem_to_hbm [thread:$0]  %s1203, 128, %s1200, %s1184
        $region44: #{tpu_custom_call.1} parent=35 // pred_fallthru
          _
        // Predicated region
        $region45: #{tpu_custom_call.1} parent=35 // pred_check
          %p1206 = pneg %p159
        $region46: #{tpu_custom_call.1} parent=35 // pred_check_branch
          %1208 = sbr.rel (%p1206) target = $region48
        $region47: #{tpu_custom_call.1} parent=35 // pred_region
          %s1210 = ssub.s32 128, 128
          %1211 = vsyncadd %s1189, %s1210
          %s1212 = smul.addr %s26, 128
          %s1213 = scalar_lea.hbm %s5, %s1212
          %s1215 = sshll.u32 %s1192, 4
          %s1216 = int_to_ptr.vmem [resolvable:$true] %s1215
          %1218 = dma.vmem_to_hbm [thread:$0]  %s1216, 128, %s1213, %s1189
        $region48: #{tpu_custom_call.1} parent=35 // pred_fallthru
          _
      $region36: #{tpu_custom_call.1} parent=5 // pred_fallthru
        _
      %p1219 = scmp.le.s32.totalorder 2, %s21
      // Predicated region
      $region49: #{tpu_custom_call.1} parent=5 // pred_check
        %p1220 = pneg %p1219
      $region50: #{tpu_custom_call.1} parent=5 // pred_check_branch
        %1222 = sbr.rel (%p1220) target = $region52
      $region51: #{tpu_custom_call.1} parent=5 // pred_region
        %s1223 = ssub.s32 %s21, 2
        // Predicated region
        $region53: #{tpu_custom_call.1} parent=51 // pred_check
          %p1224 = pneg %p139
        $region54: #{tpu_custom_call.1} parent=51 // pred_check_branch
          %1226 = sbr.rel (%p1224) target = $region56
        $region55: #{tpu_custom_call.1} parent=51 // pred_region
          %s1227 = sand.u32 %s124, 1
          %s1228 = scalar_lea.sflag [#allocation4], %s1227
          %s1229 = sand.u32 %s124, 1
          %s1230 = smul.addr %s1229, 8
          %s1231 = scalar_lea.vmem [#allocation5], %s1230
          %1232 = dma.done %s1228, 128
        $region56: #{tpu_custom_call.1} parent=51 // pred_fallthru
          _
        // Predicated region
        $region57: #{tpu_custom_call.1} parent=51 // pred_check
          %p1233 = pneg %p165
        $region58: #{tpu_custom_call.1} parent=51 // pred_check_branch
          %1235 = sbr.rel (%p1233) target = $region60
        $region59: #{tpu_custom_call.1} parent=51 // pred_region
          %s1236 = sand.u32 %s150, 1
          %s1237 = scalar_lea.sflag [#allocation7], %s1236
          %s1238 = sand.u32 %s150, 1
          %s1239 = smul.addr %s1238, 8
          %s1240 = scalar_lea.vmem [#allocation6], %s1239
          %1241 = dma.done %s1237, 128
        $region60: #{tpu_custom_call.1} parent=51 // pred_fallthru
          _
      $region52: #{tpu_custom_call.1} parent=5 // pred_fallthru
        _
    $region6: #{tpu_custom_call.1} parent=1 // loop_footer
      %s25 = sadd.s32 1, %s21
    $region7: #{tpu_custom_call.1} parent=1 // loop_footer_branch
      %20 = sbr.rel target = $region3
    $region8: #{tpu_custom_call.1} parent=1 // loop_exit
      _
    %1242 = vsyncpa [#allocation3], 1
    %s1243 = scalar_lea.sflag [#allocation3], 1
    %1244 = vsyncpa %s1243, 1
    %1245 = vsyncpa [#allocation4], 1
    %s1246 = scalar_lea.sflag [#allocation4], 1
    %1247 = vsyncpa %s1246, 1
    %1248 = vsyncpa [#allocation7], 1
    %s1249 = scalar_lea.sflag [#allocation7], 1
    %1250 = vsyncpa %s1249, 1

</llo_original>
